<compile_context>
chip_gen: v5e
topology: v5e:2x2
jax: 0.10.0
libtpu: 0.0.40
codegen_flags: <defaults>
</compile_context>

<pallas_src>
import jax
import jax.numpy as jnp
from jax.experimental import pallas as pl
from jax.experimental.pallas import tpu as pltpu


def _mlp_kernel(x_ref, w1_ref, b1_ref, w2_ref, b2_ref, o_ref):
    # hidden = relu(x @ W1 + b1); MXU matmul with f32 accumulation.
    h = jnp.dot(x_ref[...], w1_ref[...], preferred_element_type=jnp.float32)
    h = jnp.maximum(h + b1_ref[...], 0.0)              # (TB, H) + (1, H), f32 epilogue
    # out = hidden @ W2 + b2   (no activation, matches the reference forward).
    # Cast only the MXU operand; bias-add stays f32 (no-op cast on the f32 path).
    o = jnp.dot(h.astype(w2_ref.dtype), w2_ref[...],
                preferred_element_type=jnp.float32)
    o_ref[...] = (o + b2_ref[...]).astype(o_ref.dtype)


def _round_up(n, m):
    return (n + m - 1) // m * m


def net_forward(x, w1, b1, w2, b2, *, block_b=1024, use_bf16=False):
    """Fused MLP forward: relu(x @ w1 + b1) @ w2 + b2.

    x : (B, F) float32
    w1: (F, H), b1: (H,), w2: (H, O), b2: (O,)
    Weights are stored pre-transposed ([in_features, out_features]) relative to
    torch.nn.Linear so the kernel computes plain row-major matmuls on the MXU.
    """
    B, F = x.shape
    H = w1.shape[1]
    O = w2.shape[1]

    in_dt = jnp.bfloat16 if use_bf16 else jnp.float32
    gran = 16 if use_bf16 else 8          # sublanes per vreg for the input dtype

    # Batch tiling: pad B only to the sublane granule (no lane padding anywhere;
    # Mosaic pads narrow last dims inside VMEM/vregs, not in HBM).  Cap the tile
    # so the grid has >= 2 steps whenever possible (v7x has 2 TensorCores).
    Bp = _round_up(B, gran)
    half = _round_up(pl.cdiv(Bp, 2), gran)
    TB = min(_round_up(block_b, gran), Bp, half)
    grid = (pl.cdiv(Bp, TB),)             # ragged last block handled by Pallas

    xc = x.astype(in_dt)
    if Bp != B:
        xc = jnp.zeros((Bp, F), in_dt).at[:B].set(xc)

    w1c = w1.astype(in_dt)
    w2c = w2.astype(in_dt)
    b1r = b1.reshape(1, H).astype(jnp.float32)
    b2r = b2.reshape(1, O).astype(jnp.float32)

    itemsize = 2 if use_bf16 else 4
    flops = 2 * B * F * H + 2 * B * H * O
    bytes_accessed = itemsize * (B * F + F * H + H * O) + 4 * (H + O + B * O)

    # Weight/bias block indices never change: single-buffer them (double
    # buffering would only duplicate their VMEM footprint with zero overlap win).
    resident = dict(pipeline_mode=pl.Buffered(1))

    out = pl.pallas_call(
        _mlp_kernel,
        out_shape=jax.ShapeDtypeStruct((Bp, O), jnp.float32),
        grid=grid,
        in_specs=[
            pl.BlockSpec((TB, F), lambda i: (i, 0)),              # x: follows batch tile
            pl.BlockSpec((F, H), lambda i: (0, 0), **resident),   # W1: resident in VMEM
            pl.BlockSpec((1, H), lambda i: (0, 0), **resident),   # b1: resident
            pl.BlockSpec((H, O), lambda i: (0, 0), **resident),   # W2: resident
            pl.BlockSpec((1, O), lambda i: (0, 0), **resident),   # b2: resident
        ],
        out_specs=pl.BlockSpec((TB, O), lambda i: (i, 0)),
        compiler_params=pltpu.CompilerParams(
            dimension_semantics=("parallel",)),
        cost_estimate=pl.CostEstimate(
            flops=flops, transcendentals=0, bytes_accessed=bytes_accessed),
    )(xc, w1c, b1r, w2c, b2r)

    return out[:B] if Bp != B else out


def _reference(x, w1, b1, w2, b2):
    h = jnp.maximum(x @ w1 + b1, 0.0)
    return h @ w2 + b2


if __name__ == "__main__":
    # Shapes implied by the module: n_feature=12 (X = data2[:, :12]); small
    # n_hidden / n_output consistent with a classifier head.
    n_feature, n_hidden, n_output = 12, 32, 4

    key = jax.random.PRNGKey(0)
    kx, k1, k2, k3, k4, kx2 = jax.random.split(key, 6)

    lim1 = 1.0 / jnp.sqrt(n_feature)
    lim2 = 1.0 / jnp.sqrt(n_hidden)
    w1 = jax.random.uniform(k1, (n_feature, n_hidden), jnp.float32, -lim1, lim1)
    b1 = jax.random.uniform(k2, (n_hidden,), jnp.float32, -lim1, lim1)
    w2 = jax.random.uniform(k3, (n_hidden, n_output), jnp.float32, -lim2, lim2)
    b2 = jax.random.uniform(k4, (n_output,), jnp.float32, -lim2, lim2)

    # --- single-tile path (tiny batch, like the original module's usage) ---
    B = 8
    x = jax.random.normal(kx, (B, n_feature), dtype=jnp.float32)
    out = jax.block_until_ready(net_forward(x, w1, b1, w2, b2))
    ref = _reference(x, w1, b1, w2, b2)
    assert out.shape == (B, n_output)
    assert jnp.allclose(out, ref, atol=1e-5, rtol=1e-5), "mismatch vs reference (B=8)"

    # --- multi-tile, ragged batch (grid > 1, resident weights, cdiv grid) ---
    B2 = 70
    x2 = jax.random.normal(kx2, (B2, n_feature), dtype=jnp.float32)
    out2 = jax.block_until_ready(net_forward(x2, w1, b1, w2, b2, block_b=32))
    ref2 = _reference(x2, w1, b1, w2, b2)
    assert out2.shape == (B2, n_output)
    assert jnp.allclose(out2, ref2, atol=1e-5, rtol=1e-5), "mismatch vs reference (B=70)"

    # --- bf16 fast path (MXU operands bf16, f32 accumulate / epilogue) ---
    out3 = jax.block_until_ready(net_forward(x2, w1, b1, w2, b2, use_bf16=True))
    assert out3.shape == (B2, n_output)
    assert jnp.allclose(out3, ref2, atol=5e-2, rtol=5e-2), "mismatch vs reference (bf16)"

    print("KERNEL_OK")
</pallas_src>

<mosaic_0001>
module attributes {stable_mosaic.version = 11 : i64} {
  func.func @_mlp_kernel(%arg0: i32, %arg1: memref<8x12xf32, #tpu.memory_space<vmem>>, %arg2: memref<12x32xf32, #tpu.memory_space<vmem>>, %arg3: memref<1x32xf32, #tpu.memory_space<vmem>>, %arg4: memref<32x4xf32, #tpu.memory_space<vmem>>, %arg5: memref<1x4xf32, #tpu.memory_space<vmem>>, %arg6: memref<8x4xf32, #tpu.memory_space<vmem>>) attributes {dimension_semantics = [#tpu.dimension_semantics<parallel>], iteration_bounds = array<i64: 1>, scalar_prefetch = 0 : i64, scratch_operands = 0 : i64, tpu.core_type = #tpu.core_type<tc>, window_params = [{transform_indices = @transform_0, window_bounds = array<i64: 8, 12>}, {pipeline_mode = #tpu.pipeline_mode<synchronous>, transform_indices = @transform_1, window_bounds = array<i64: 12, 32>}, {pipeline_mode = #tpu.pipeline_mode<synchronous>, transform_indices = @transform_2, window_bounds = array<i64: 1, 32>}, {pipeline_mode = #tpu.pipeline_mode<synchronous>, transform_indices = @transform_3, window_bounds = array<i64: 32, 4>}, {pipeline_mode = #tpu.pipeline_mode<synchronous>, transform_indices = @transform_4, window_bounds = array<i64: 1, 4>}, {transform_indices = @transform_5, window_bounds = array<i64: 8, 4>}]} {
    %c0 = arith.constant 0 : index
    %c0_0 = arith.constant 0 : index
    %0 = vector.load %arg1[%c0, %c0_0] : memref<8x12xf32, #tpu.memory_space<vmem>>, vector<8x12xf32>
    %c0_1 = arith.constant 0 : index
    %c0_2 = arith.constant 0 : index
    %1 = vector.load %arg2[%c0_1, %c0_2] : memref<12x32xf32, #tpu.memory_space<vmem>>, vector<12x32xf32>
    %cst = arith.constant dense<0.000000e+00> : vector<8x32xf32>
    %2 = tpu.matmul %0, %1, %cst {dimension_numbers = #tpu.dot_dimension_numbers<[1], [0], [0], [1], [0, 0, 1, 1], [], []>} : vector<8x12xf32>, vector<12x32xf32>, vector<8x32xf32> -> vector<8x32xf32>
    %c0_3 = arith.constant 0 : index
    %c0_4 = arith.constant 0 : index
    %3 = vector.load %arg3[%c0_3, %c0_4] : memref<1x32xf32, #tpu.memory_space<vmem>>, vector<1x32xf32>
    %4 = vector.broadcast %3 : vector<1x32xf32> to vector<8x32xf32>
    %5 = arith.addf %2, %4 : vector<8x32xf32>
    %cst_5 = arith.constant 0.000000e+00 : f32
    %6 = vector.broadcast %cst_5 : f32 to vector<8x32xf32>
    %7 = arith.maximumf %5, %6 : vector<8x32xf32>
    %c0_6 = arith.constant 0 : index
    %c0_7 = arith.constant 0 : index
    %8 = vector.load %arg4[%c0_6, %c0_7] : memref<32x4xf32, #tpu.memory_space<vmem>>, vector<32x4xf32>
    %cst_8 = arith.constant dense<0.000000e+00> : vector<8x4xf32>
    %9 = tpu.matmul %7, %8, %cst_8 {dimension_numbers = #tpu.dot_dimension_numbers<[1], [0], [0], [1], [0, 0, 1, 1], [], []>} : vector<8x32xf32>, vector<32x4xf32>, vector<8x4xf32> -> vector<8x4xf32>
    %c0_9 = arith.constant 0 : index
    %c0_10 = arith.constant 0 : index
    %10 = vector.load %arg5[%c0_9, %c0_10] : memref<1x4xf32, #tpu.memory_space<vmem>>, vector<1x4xf32>
    %11 = vector.broadcast %10 : vector<1x4xf32> to vector<8x4xf32>
    %12 = arith.addf %9, %11 : vector<8x4xf32>
    %c0_11 = arith.constant 0 : index
    %c0_12 = arith.constant 0 : index
    %13 = vector.load %arg6[%c0_11, %c0_12] : memref<8x4xf32, #tpu.memory_space<vmem>>, vector<8x4xf32>
    tpu.vector_store %arg6[%c0_11, %c0_12], %12 {strides = array<i32>} : memref<8x4xf32, #tpu.memory_space<vmem>>, vector<8x4xf32>,
    return
  }
  func.func @transform_0(%arg0: i32) -> (i32, i32) {
    %c0_i32 = arith.constant 0 : i32
    %c0_i32_0 = arith.constant 0 : i32
    return %arg0, %c0_i32 : i32, i32
  }
  func.func @transform_1(%arg0: i32) -> (i32, i32) {
    %c0_i32 = arith.constant 0 : i32
    %c0_i32_0 = arith.constant 0 : i32
    %c0_i32_1 = arith.constant 0 : i32
    return %c0_i32, %c0_i32_0 : i32, i32
  }
  func.func @transform_2(%arg0: i32) -> (i32, i32) {
    %c0_i32 = arith.constant 0 : i32
    %c0_i32_0 = arith.constant 0 : i32
    %c0_i32_1 = arith.constant 0 : i32
    return %c0_i32, %c0_i32_0 : i32, i32
  }
  func.func @transform_3(%arg0: i32) -> (i32, i32) {
    %c0_i32 = arith.constant 0 : i32
    %c0_i32_0 = arith.constant 0 : i32
    %c0_i32_1 = arith.constant 0 : i32
    return %c0_i32, %c0_i32_0 : i32, i32
  }
  func.func @transform_4(%arg0: i32) -> (i32, i32) {
    %c0_i32 = arith.constant 0 : i32
    %c0_i32_0 = arith.constant 0 : i32
    %c0_i32_1 = arith.constant 0 : i32
    return %c0_i32, %c0_i32_0 : i32, i32
  }
  func.func @transform_5(%arg0: i32) -> (i32, i32) {
    %c0_i32 = arith.constant 0 : i32
    %c0_i32_0 = arith.constant 0 : i32
    return %arg0, %c0_i32 : i32, i32
  }
}

</mosaic_0001>

<llo_original>
// kernel: tpu_custom_call.1
$region0: #{tpu_custom_call.1}
  #allocation0 [shape = 'u32[]', space=smem, size = 0x4, offset = 0x4, fixed_abs, tag = 'smem constant byte address 0x4 - core index']
  #allocation1 [shape = 'u32[72,128]{1,0:T(1,128)}', space=vmem, size = 0x9000, scoped, tag = 'internal scratch']
  %s0 = inlined_call_operand.vmem [shape: f32[8,12], index: 0, kind: input, shape index: {}]
  %s1 = inlined_call_operand.vmem [shape: f32[12,32], index: 1, kind: input, shape index: {}]
  %s2 = inlined_call_operand.vmem [shape: f32[1,32], index: 2, kind: input, shape index: {}]
  %s3 = inlined_call_operand.vmem [shape: f32[32,4], index: 3, kind: input, shape index: {}]
  %s4 = inlined_call_operand.vmem [shape: f32[1,4], index: 4, kind: input, shape index: {}]
  %s5 = inlined_call_operand.vmem [shape: f32[8,4], index: 5, kind: output, shape index: {}]
  %s6 = sld [smem:[#allocation0]]
  $region30: #{tpu_custom_call.1} parent=0
    _
  %s8 = ssub.s32 1, %s6
  %s9 = scalar_select 0, %s8, %s6
  // Predicated region
  $region2: #{tpu_custom_call.1} parent=0 // pred_check
    _
  $region3: #{tpu_custom_call.1} parent=0 // pred_check_branch
    %11 = sbr.rel (0) target = $region5
  $region4: #{tpu_custom_call.1} parent=0 // pred_region
    _
  $region5: #{tpu_custom_call.1} parent=0 // pred_fallthru
    _
  // Predicated region
  $region6: #{tpu_custom_call.1} parent=0 // pred_check
    _
  $region7: #{tpu_custom_call.1} parent=0 // pred_check_branch
    %13 = sbr.rel (0) target = $region9
  $region8: #{tpu_custom_call.1} parent=0 // pred_region
    _
  $region9: #{tpu_custom_call.1} parent=0 // pred_fallthru
    _
  // Predicated region
  $region10: #{tpu_custom_call.1} parent=0 // pred_check
    _
  $region11: #{tpu_custom_call.1} parent=0 // pred_check_branch
    %15 = sbr.rel (0) target = $region13
  $region12: #{tpu_custom_call.1} parent=0 // pred_region
    _
  $region13: #{tpu_custom_call.1} parent=0 // pred_fallthru
    _
  // Predicated region
  $region14: #{tpu_custom_call.1} parent=0 // pred_check
    _
  $region15: #{tpu_custom_call.1} parent=0 // pred_check_branch
    %17 = sbr.rel (0) target = $region17
  $region16: #{tpu_custom_call.1} parent=0 // pred_region
    _
  $region17: #{tpu_custom_call.1} parent=0 // pred_fallthru
    _
  // Predicated region
  $region18: #{tpu_custom_call.1} parent=0 // pred_check
    _
  $region19: #{tpu_custom_call.1} parent=0 // pred_check_branch
    %19 = sbr.rel (0) target = $region21
  $region20: #{tpu_custom_call.1} parent=0 // pred_region
    _
  $region21: #{tpu_custom_call.1} parent=0 // pred_fallthru
    _
  %v20 = vld [vmem:[%s0] sm:$0xff]
  %v21 = vld [vmem:[%s1] sm:$0xff]
  %v22 = vld [vmem:[%s1 + $0x8] sm:$0xf]
  %v23 = vld [vmem:[%s2] sm:$0x1]
  %v25 = vperm.slane %v23, 0
  %vm27 = vcmask 97280
  %v29 = vsel %vm27, %v20, 0
  %vm31 = vcmask 1043456
  %v33 = vsel %vm31, %v22, 0
  %35 = vmatpush.msra.mxu0 0.0
  %36 = vmatpush.msra.mxu0 0.0
  %37 = vmatpush.msra.mxu0 0.0
  %38 = vmatpush.msra.mxu0 0.0
  %39 = vmatpush.msra.mxu0 0.0
  %40 = vmatpush.msra.mxu0 0.0
  %41 = vmatpush.msra.mxu0 0.0
  %42 = vmatpush.msra.mxu0 0.0
  %43 = vmatpush.msra.mxu0 0.0
  %44 = vmatpush.msra.mxu0 0.0
  %45 = vmatpush.msra.mxu0 0.0
  %46 = vmatpush.msra.mxu0 0.0
  %47 = vmatpush.msra.mxu0 0.0
  %48 = vmatpush.msra.mxu0 0.0
  %49 = vmatpush.msra.mxu0 %v33
  %50 = vmatpush.msra.mxu0 %v21
  %51 = vmatmul.f32.gmra.mxu0 %v29
  %v52 = vpop.f32.mrf.mxu0
  %v53 = vadd.f32 %v25, %v52
  %54 = vdwg.mxu0
  %v55 = vmax.f32 %v53, 0.0
  %v56 = vld [vmem:[%s3] sm:$0xff]
  %v57 = vld [vmem:[%s3 + $0x8] sm:$0xff]
  %v58 = vld [vmem:[%s3 + $0x10] sm:$0xff]
  %v59 = vld [vmem:[%s3 + $0x18] sm:$0xff]
  %v60 = vld [vmem:[%s4] sm:$0x1]
  %v62 = vperm.slane %v60, 0
  %vm64 = vcmask 261120
  %v66 = vsel %vm64, %v55, 0
  %68 = vmatpush.msra.mxu0 0.0
  %69 = vmatpush.msra.mxu0 0.0
  %70 = vmatpush.msra.mxu0 0.0
  %71 = vmatpush.msra.mxu0 0.0
  %72 = vmatpush.msra.mxu0 0.0
  %73 = vmatpush.msra.mxu0 0.0
  %74 = vmatpush.msra.mxu0 0.0
  %75 = vmatpush.msra.mxu0 0.0
  %76 = vmatpush.msra.mxu0 0.0
  %77 = vmatpush.msra.mxu0 0.0
  %78 = vmatpush.msra.mxu0 0.0
  %79 = vmatpush.msra.mxu0 0.0
  %80 = vmatpush.msra.mxu0 %v59
  %81 = vmatpush.msra.mxu0 %v58
  %82 = vmatpush.msra.mxu0 %v57
  %83 = vmatpush.msra.mxu0 %v56
  %84 = vmatmul.f32.gmra.mxu0 %v66
  %v85 = vpop.f32.mrf.mxu0
  %v86 = vadd.f32 %v62, %v85
  %87 = vdwg.mxu0
  %vm88 = vcmask 31744
  %89 = vst.msk [vmem:[%s5] sm:$0xff] %vm88, %v86
  // Predicated region
  $region22: #{tpu_custom_call.1} parent=0 // pred_check
    _
  $region23: #{tpu_custom_call.1} parent=0 // pred_check_branch
    %91 = sbr.rel (0) target = $region25
  $region24: #{tpu_custom_call.1} parent=0 // pred_region
    _
  $region25: #{tpu_custom_call.1} parent=0 // pred_fallthru
    _
  // Predicated region
  $region26: #{tpu_custom_call.1} parent=0 // pred_check
    _
  $region27: #{tpu_custom_call.1} parent=0 // pred_check_branch
    %93 = sbr.rel (0) target = $region29
  $region28: #{tpu_custom_call.1} parent=0 // pred_region
    _
  $region29: #{tpu_custom_call.1} parent=0 // pred_fallthru
    _

</llo_original>
